<compile_context>
chip_gen: v7x
topology: tpu7x:2x2x1
jax: 0.10.0
libtpu: 0.0.40
codegen_flags: <defaults>
</compile_context>

<pallas_src>
import functools

import jax
import jax.numpy as jnp
from jax.experimental import pallas as pl
from jax.experimental.pallas import tpu as pltpu


def _round_up(v, m):
    return ((v + m - 1) // m) * m


def _coupling_fwd_kernel(x_ref, w1t_ref, b1_ref, w2t_ref, b2_ref,
                         z_ref, logdet_ref):
    """One batch tile in transposed (feature, batch) layout.

    x_ref   : (D, TB)     input slab (x1 = rows [:D/2], x2 = rows [D/2:])
    w1t_ref : (H, D/2)    W1^T          b1_ref : (H, 1)
    w2t_ref : (D, H)      W2^T          b2_ref : (D, 1)
    z_ref   : (D, TB)     logdet_ref : (1, TB)
    """
    d = x_ref.shape[0]
    half = d // 2

    x1 = x_ref[:half, :]                                        # (half, TB) f32
    x2 = x_ref[half:, :]                                        # (half, TB)

    # small MLP producing scale / shift (MXU matmuls, f32 accumulate)
    h = jnp.tanh(
        jnp.dot(w1t_ref[...], x1, preferred_element_type=jnp.float32)
        + b1_ref[...]
    )                                                           # (H, TB)
    st = (
        jnp.dot(w2t_ref[...], h, preferred_element_type=jnp.float32)
        + b2_ref[...]
    )                                                           # (D, TB)
    s = jnp.tanh(st[:half, :])                                  # (half, TB)
    t = st[half:, :]                                            # (half, TB)

    z2 = x2 * jnp.exp(s) + t

    # two sublane-aligned stores (half == one f32 sublane block) — no lane concat
    z_ref[:half, :] = x1.astype(z_ref.dtype)
    z_ref[half:, :] = z2.astype(z_ref.dtype)
    # single XLU sublane reduce for the log-determinant, lane-dense output row
    logdet_ref[...] = jnp.sum(s, axis=0, keepdims=True).astype(logdet_ref.dtype)


@functools.partial(jax.jit, static_argnames=("tile_b",))
def flow_forward(x, w1, b1, w2, b2, *, tile_b=1024):
    """BaseFlowModel.forward: returns (z, log_det) with log_det shape (N, 1).

    x: (N, D); w1: (D/2, H); b1: (1, H); w2: (H, D); b2: (1, D).
    """
    assert tile_b % 128 == 0, "tile_b must be a multiple of 128 (lane width)"
    n, d = x.shape
    assert d % 2 == 0, "input_dim must be even for the coupling split"
    half = d // 2
    hidden = w1.shape[1]

    # batch tile: multiple of 128 lanes, capped at (padded) batch size
    tb = min(tile_b, _round_up(n, 128))
    n_pad = _round_up(n, tb)

    # --- wrapper-side layout plumbing (transposes / bias reshapes only) -------
    xt = x.T                                                    # (D, N)
    if n_pad != n:
        xt = jnp.pad(xt, ((0, 0), (0, n_pad - n)))
    w1t = w1.T                                                  # (H, half)
    b1t = b1.reshape(hidden, 1)                                 # (H, 1)
    w2t = w2.T                                                  # (D, H)
    b2t = b2.reshape(d, 1)                                      # (D, 1)

    grid = (n_pad // tb,)

    out_shapes = (
        jax.ShapeDtypeStruct((d, n_pad), x.dtype),              # z (transposed)
        jax.ShapeDtypeStruct((1, n_pad), jnp.float32),          # log_det (row)
    )
    in_specs = [
        pl.BlockSpec((d, tb), lambda i: (0, i)),                # x tile
        pl.BlockSpec((hidden, half), lambda i: (0, 0)),         # W1^T (resident)
        pl.BlockSpec((hidden, 1), lambda i: (0, 0)),            # b1
        pl.BlockSpec((d, hidden), lambda i: (0, 0)),            # W2^T (resident)
        pl.BlockSpec((d, 1), lambda i: (0, 0)),                 # b2
    ]
    out_specs = (
        pl.BlockSpec((d, tb), lambda i: (0, i)),                # z
        pl.BlockSpec((1, tb), lambda i: (0, i)),                # log_det
    )

    cost = pl.CostEstimate(
        flops=n_pad * (2 * half * hidden + 2 * hidden * d + 4 * half),
        transcendentals=n_pad * (hidden + d),
        bytes_accessed=4 * (2 * n_pad * d + n_pad)
        + 4 * (half * hidden + hidden + hidden * d + d),
    )

    zt, ldt = pl.pallas_call(
        _coupling_fwd_kernel,
        out_shape=out_shapes,
        grid_spec=pltpu.PrefetchScalarGridSpec(
            num_scalar_prefetch=0,
            grid=grid,
            in_specs=in_specs,
            out_specs=out_specs,
        ),
        compiler_params=pltpu.CompilerParams(
            dimension_semantics=("parallel",),
        ),
        cost_estimate=cost,
    )(xt, w1t, b1t, w2t, b2t)

    # back to the (N, D) / (N, 1) contract of BaseFlowModel.forward
    z = zt[:, :n].T
    log_det = ldt[:, :n].T
    return z, log_det


def _reference_forward(x, w1, b1, w2, b2):
    """Pure-JAX reference matching the coupling-flow forward."""
    d = x.shape[-1]
    half = d // 2
    x1, x2 = x[:, :half], x[:, half:]
    h = jnp.tanh(x1 @ w1 + b1)
    st = h @ w2 + b2
    s = jnp.tanh(st[:, :half])
    t = st[:, half:]
    z = jnp.concatenate([x1, x2 * jnp.exp(s) + t], axis=-1)
    log_det = jnp.sum(s, axis=-1, keepdims=True)
    return z, log_det


if __name__ == "__main__":
    # tabular flow shapes: batch=512, input_dim=16, hidden=32 (small, grid=2)
    N, D, H = 512, 16, 32
    half = D // 2

    key = jax.random.PRNGKey(0)
    kx, k1, k2 = jax.random.split(key, 3)
    x = jax.random.normal(kx, (N, D), dtype=jnp.float32)

    # deterministic parameter init (synthetic weights, not a checkpoint)
    w1 = jax.random.normal(k1, (half, H), dtype=jnp.float32) * 0.1
    b1 = jnp.zeros((1, H), dtype=jnp.float32)
    w2 = jax.random.normal(k2, (H, D), dtype=jnp.float32) * 0.1
    b2 = jnp.zeros((1, D), dtype=jnp.float32)

    z, log_det = flow_forward(x, w1, b1, w2, b2, tile_b=256)
    jax.block_until_ready((z, log_det))

    z_ref, log_det_ref = _reference_forward(x, w1, b1, w2, b2)
    assert z.shape == (N, D) and log_det.shape == (N, 1)
    assert jnp.allclose(z, z_ref, atol=1e-5, rtol=1e-5)
    assert jnp.allclose(log_det, log_det_ref, atol=1e-5, rtol=1e-5)

    print("KERNEL_OK")
</pallas_src>

<mosaic_0001>
module attributes {stable_mosaic.version = 11 : i64} {
  func.func @_coupling_fwd_kernel(%arg0: i32, %arg1: memref<16x256xf32, #tpu.memory_space<vmem>>, %arg2: memref<32x8xf32, #tpu.memory_space<vmem>>, %arg3: memref<32x1xf32, #tpu.memory_space<vmem>>, %arg4: memref<16x32xf32, #tpu.memory_space<vmem>>, %arg5: memref<16x1xf32, #tpu.memory_space<vmem>>, %arg6: memref<16x256xf32, #tpu.memory_space<vmem>>, %arg7: memref<1x256xf32, #tpu.memory_space<vmem>>) attributes {dimension_semantics = [#tpu.dimension_semantics<parallel>], iteration_bounds = array<i64: 2>, scalar_prefetch = 0 : i64, scratch_operands = 0 : i64, tpu.core_type = #tpu.core_type<tc>, window_params = [{transform_indices = @transform_0, window_bounds = array<i64: 16, 256>}, {pipeline_mode = #tpu.pipeline_mode<synchronous>, transform_indices = @transform_1, window_bounds = array<i64: 32, 8>}, {pipeline_mode = #tpu.pipeline_mode<synchronous>, transform_indices = @transform_2, window_bounds = array<i64: 32, 1>}, {pipeline_mode = #tpu.pipeline_mode<synchronous>, transform_indices = @transform_3, window_bounds = array<i64: 16, 32>}, {pipeline_mode = #tpu.pipeline_mode<synchronous>, transform_indices = @transform_4, window_bounds = array<i64: 16, 1>}, {transform_indices = @transform_5, window_bounds = array<i64: 16, 256>}, {transform_indices = @transform_6, window_bounds = array<i64: 1, 256>}]} {
    %c0 = arith.constant 0 : index
    %c0_0 = arith.constant 0 : index
    %0 = vector.load %arg1[%c0, %c0_0] : memref<16x256xf32, #tpu.memory_space<vmem>>, vector<8x256xf32>
    %c8 = arith.constant 8 : index
    %c0_1 = arith.constant 0 : index
    %1 = vector.load %arg1[%c8, %c0_1] : memref<16x256xf32, #tpu.memory_space<vmem>>, vector<8x256xf32>
    %c0_2 = arith.constant 0 : index
    %c0_3 = arith.constant 0 : index
    %2 = vector.load %arg2[%c0_2, %c0_3] : memref<32x8xf32, #tpu.memory_space<vmem>>, vector<32x8xf32>
    %cst = arith.constant dense<0.000000e+00> : vector<32x256xf32>
    %3 = tpu.matmul %2, %0, %cst {dimension_numbers = #tpu.dot_dimension_numbers<[1], [0], [0], [1], [0, 0, 1, 1], [], []>} : vector<32x8xf32>, vector<8x256xf32>, vector<32x256xf32> -> vector<32x256xf32>
    %c0_4 = arith.constant 0 : index
    %c0_5 = arith.constant 0 : index
    %4 = vector.load %arg3[%c0_4, %c0_5] : memref<32x1xf32, #tpu.memory_space<vmem>>, vector<32x1xf32>
    %5 = vector.broadcast %4 : vector<32x1xf32> to vector<32x256xf32>
    %6 = arith.addf %3, %5 : vector<32x256xf32>
    %7 = math.tanh %6 : vector<32x256xf32>
    %c0_6 = arith.constant 0 : index
    %c0_7 = arith.constant 0 : index
    %8 = vector.load %arg4[%c0_6, %c0_7] : memref<16x32xf32, #tpu.memory_space<vmem>>, vector<16x32xf32>
    %cst_8 = arith.constant dense<0.000000e+00> : vector<16x256xf32>
    %9 = tpu.matmul %8, %7, %cst_8 {dimension_numbers = #tpu.dot_dimension_numbers<[1], [0], [0], [1], [0, 0, 1, 1], [], []>} : vector<16x32xf32>, vector<32x256xf32>, vector<16x256xf32> -> vector<16x256xf32>
    %c0_9 = arith.constant 0 : index
    %c0_10 = arith.constant 0 : index
    %10 = vector.load %arg5[%c0_9, %c0_10] : memref<16x1xf32, #tpu.memory_space<vmem>>, vector<16x1xf32>
    %11 = vector.broadcast %10 : vector<16x1xf32> to vector<16x256xf32>
    %12 = arith.addf %9, %11 : vector<16x256xf32>
    %13 = vector.extract_strided_slice %12 {offsets = [0, 0], sizes = [8, 256], strides = [1, 1]} : vector<16x256xf32> to vector<8x256xf32>
    %14 = math.tanh %13 : vector<8x256xf32>
    %15 = vector.extract_strided_slice %12 {offsets = [8, 0], sizes = [8, 256], strides = [1, 1]} : vector<16x256xf32> to vector<8x256xf32>
    %16 = math.exp %14 : vector<8x256xf32>
    %17 = arith.mulf %1, %16 : vector<8x256xf32>
    %18 = arith.addf %17, %15 : vector<8x256xf32>
    %c0_11 = arith.constant 0 : index
    %c0_12 = arith.constant 0 : index
    %19 = vector.load %arg6[%c0_11, %c0_12] : memref<16x256xf32, #tpu.memory_space<vmem>>, vector<8x256xf32>
    tpu.vector_store %arg6[%c0_11, %c0_12], %0 {strides = array<i32>} : memref<16x256xf32, #tpu.memory_space<vmem>>, vector<8x256xf32>,
    %c8_13 = arith.constant 8 : index
    %c0_14 = arith.constant 0 : index
    %20 = vector.load %arg6[%c8_13, %c0_14] : memref<16x256xf32, #tpu.memory_space<vmem>>, vector<8x256xf32>
    tpu.vector_store %arg6[%c8_13, %c0_14], %18 {strides = array<i32>} : memref<16x256xf32, #tpu.memory_space<vmem>>, vector<8x256xf32>,
    %cst_15 = arith.constant dense<0.000000e+00> : vector<256xf32>
    %21 = vector.multi_reduction <add>, %14, %cst_15 [0] : vector<8x256xf32> to vector<256xf32>
    %22 = vector.shape_cast %21 : vector<256xf32> to vector<1x256xf32>
    %c0_16 = arith.constant 0 : index
    %c0_17 = arith.constant 0 : index
    %23 = vector.load %arg7[%c0_16, %c0_17] : memref<1x256xf32, #tpu.memory_space<vmem>>, vector<1x256xf32>
    tpu.vector_store %arg7[%c0_16, %c0_17], %22 {strides = array<i32>} : memref<1x256xf32, #tpu.memory_space<vmem>>, vector<1x256xf32>,
    return
  }
  func.func @transform_0(%arg0: i32) -> (i32, i32) {
    %c0_i32 = arith.constant 0 : i32
    %c0_i32_0 = arith.constant 0 : i32
    return %c0_i32, %arg0 : i32, i32
  }
  func.func @transform_1(%arg0: i32) -> (i32, i32) {
    %c0_i32 = arith.constant 0 : i32
    %c0_i32_0 = arith.constant 0 : i32
    %c0_i32_1 = arith.constant 0 : i32
    return %c0_i32, %c0_i32_0 : i32, i32
  }
  func.func @transform_2(%arg0: i32) -> (i32, i32) {
    %c0_i32 = arith.constant 0 : i32
    %c0_i32_0 = arith.constant 0 : i32
    %c0_i32_1 = arith.constant 0 : i32
    return %c0_i32, %c0_i32_0 : i32, i32
  }
  func.func @transform_3(%arg0: i32) -> (i32, i32) {
    %c0_i32 = arith.constant 0 : i32
    %c0_i32_0 = arith.constant 0 : i32
    %c0_i32_1 = arith.constant 0 : i32
    return %c0_i32, %c0_i32_0 : i32, i32
  }
  func.func @transform_4(%arg0: i32) -> (i32, i32) {
    %c0_i32 = arith.constant 0 : i32
    %c0_i32_0 = arith.constant 0 : i32
    %c0_i32_1 = arith.constant 0 : i32
    return %c0_i32, %c0_i32_0 : i32, i32
  }
  func.func @transform_5(%arg0: i32) -> (i32, i32) {
    %c0_i32 = arith.constant 0 : i32
    %c0_i32_0 = arith.constant 0 : i32
    return %c0_i32, %arg0 : i32, i32
  }
  func.func @transform_6(%arg0: i32) -> (i32, i32) {
    %c0_i32 = arith.constant 0 : i32
    %c0_i32_0 = arith.constant 0 : i32
    return %c0_i32, %arg0 : i32, i32
  }
}

</mosaic_0001>

<llo_original>
// kernel: flow_forward.1
$region0: #{flow_forward.1}
  #allocation0 [shape = 'u32[]', space=smem, size = 0x4, offset = 0x4, fixed_abs, tag = 'smem constant byte address 0x4 - core index']
  #allocation1 [shape = 'u32[144,128]{1,0:T(1,128)}', space=vmem, size = 0x12000, scoped, tag = 'internal scratch']
  %s0 = inlined_call_operand.vmem [shape: f32[16,512], index: 0, kind: input, shape index: {}]
  %s1 = inlined_call_operand.vmem [shape: f32[32,8], index: 1, kind: input, shape index: {}]
  %s2 = inlined_call_operand.vmem [shape: f32[32,1], index: 2, kind: input, shape index: {}]
  %s3 = inlined_call_operand.vmem [shape: f32[16,32], index: 3, kind: input, shape index: {}]
  %s4 = inlined_call_operand.vmem [shape: f32[16,1], index: 4, kind: input, shape index: {}]
  %s5 = inlined_call_operand.hbm [shape: f32[16,512], index: 5, kind: output, shape index: {0}]
  %s6 = inlined_call_operand.hbm [shape: f32[1,512], index: 6, kind: output, shape index: {1}]
  %7 = xla_tuple %s5, %s6
  %s8 = sld [smem:[#allocation0]]
  $region84: #{flow_forward.1} parent=0
    _
  %s10 = ssub.s32 1, %s8
  %s11 = scalar_select 0, %s10, %s8
  $region1: #{flow_forward.1} parent=0
    #allocation2 [shape = 'u8[32768]{0}', space=vmem, size = 0x8000, scoped, tag = 'input window, operand 0']
    #allocation3 [shape = 'u8[32768]{0}', space=vmem, size = 0x8000, scoped, tag = 'output window, operand 0']
    #allocation4 [shape = 's32[2]{0}', space=sflag, size = 0x8, scoped, tag = 'scoped memory for flow_forward.1']
    #allocation5 [shape = 'u8[2048]{0}', space=vmem, size = 0x800, scoped, tag = 'output window, operand 1']
    #allocation6 [shape = 's32[2]{0}', space=sflag, size = 0x8, scoped, tag = 'scoped memory for flow_forward.1']
    %12 = vsyncpa [#allocation4], 0
    %s13 = scalar_lea.sflag [#allocation4], 1
    %14 = vsyncpa %s13, 0
    %15 = vsyncpa [#allocation6], 0
    %s16 = scalar_lea.sflag [#allocation6], 1
    %17 = vsyncpa %s16, 0
    loop: start=0, step=1, limit=4
    $region2: #{flow_forward.1} parent=1 // loop_pre_header
      _
    $region3: #{flow_forward.1} parent=1 // loop_header
      %s19 = sphi 0, %s23
      %p20 = scmp.ge.s32.totalorder %s19, 4
      %s29 = sphi 0, %s31
      %s32 = sphi 0, %s29
      %s33 = sphi 0, %s32
      %s49 = sphi 0, %s33
      %s53 = sphi 0, %s53
      %s55 = sphi 0, %s53
      %s56 = sphi 0, %s55
      %s70 = sphi 0, %s56
      %s74 = sphi 0, %s74
      %s76 = sphi 0, %s74
      %s77 = sphi 0, %s76
      %s91 = sphi 0, %s77
      %s95 = sphi 0, %s95
      %s97 = sphi 0, %s95
      %s98 = sphi 0, %s97
      %s112 = sphi 0, %s98
      %s116 = sphi 0, %s116
      %s118 = sphi 0, %s116
      %s119 = sphi 0, %s118
      %s133 = sphi 0, %s119
      %s139 = sphi 0, %s141
      %s142 = sphi 0, %s139
      %s143 = sphi 0, %s142
      %s159 = sphi 0, %s143
      %s165 = sphi 0, %s167
      %s168 = sphi 0, %s165
      %s169 = sphi 0, %s168
      %s185 = sphi 0, %s169
    $region4: #{flow_forward.1} parent=1 // loop_header_branch
      %22 = sbr.rel (%p20) target = $region8
    $region5: #{flow_forward.1} parent=1 // loop_body
      %s24 = ssub.s32 %s19, 1
      %s25 = ssub.s32 %s19, 2
      %s26 = sadd.s32 %s19, 1
      %s27 = ssub.s32 %s19, %s26
      %p28 = scmp.eq.s32.totalorder %s27, 0
      %s30 = sadd.s32 %s29, 1
      %s31 = scalar_select %p28, %s29, %s30
      %p34 = pneg %p28
      %p35 = scmp.eq.s32.totalorder %s19, 1
      %p36 = por %p34, %p35
      %p37 = scmp.ne.s32.totalorder %s29, %s32
      %p38 = scmp.eq.s32.totalorder %s19, 0
      %p39 = por %p37, %p38
      %p40 = scmp.ne.s32.totalorder %s29, %s32
      %p41 = scmp.eq.s32.totalorder %s24, 1
      %p42 = por %p40, %p41
      %p43 = scmp.ne.s32.totalorder %s32, %s33
      %p44 = scmp.eq.s32.totalorder %s24, 0
      %p45 = por %p43, %p44
      %p46 = scmp.ne.s32.totalorder %s32, %s33
      %p47 = scmp.eq.s32.totalorder %s25, 1
      %p48 = por %p46, %p47
      %p50 = scmp.ne.s32.totalorder %s33, %s49
      %p51 = scmp.eq.s32.totalorder %s25, 0
      %p52 = por %p50, %p51
      %s54 = sadd.s32 %s53, 1
      %p57 = scmp.eq.s32.totalorder %s19, 1
      %p58 = scmp.ne.s32.totalorder %s53, %s55
      %p59 = scmp.eq.s32.totalorder %s19, 0
      %p60 = por %p58, %p59
      %p61 = scmp.ne.s32.totalorder %s53, %s55
      %p62 = scmp.eq.s32.totalorder %s24, 1
      %p63 = por %p61, %p62
      %p64 = scmp.ne.s32.totalorder %s55, %s56
      %p65 = scmp.eq.s32.totalorder %s24, 0
      %p66 = por %p64, %p65
      %p67 = scmp.ne.s32.totalorder %s55, %s56
      %p68 = scmp.eq.s32.totalorder %s25, 1
      %p69 = por %p67, %p68
      %p71 = scmp.ne.s32.totalorder %s56, %s70
      %p72 = scmp.eq.s32.totalorder %s25, 0
      %p73 = por %p71, %p72
      %s75 = sadd.s32 %s74, 1
      %p78 = scmp.eq.s32.totalorder %s19, 1
      %p79 = scmp.ne.s32.totalorder %s74, %s76
      %p80 = scmp.eq.s32.totalorder %s19, 0
      %p81 = por %p79, %p80
      %p82 = scmp.ne.s32.totalorder %s74, %s76
      %p83 = scmp.eq.s32.totalorder %s24, 1
      %p84 = por %p82, %p83
      %p85 = scmp.ne.s32.totalorder %s76, %s77
      %p86 = scmp.eq.s32.totalorder %s24, 0
      %p87 = por %p85, %p86
      %p88 = scmp.ne.s32.totalorder %s76, %s77
      %p89 = scmp.eq.s32.totalorder %s25, 1
      %p90 = por %p88, %p89
      %p92 = scmp.ne.s32.totalorder %s77, %s91
      %p93 = scmp.eq.s32.totalorder %s25, 0
      %p94 = por %p92, %p93
      %s96 = sadd.s32 %s95, 1
      %p99 = scmp.eq.s32.totalorder %s19, 1
      %p100 = scmp.ne.s32.totalorder %s95, %s97
      %p101 = scmp.eq.s32.totalorder %s19, 0
      %p102 = por %p100, %p101
      %p103 = scmp.ne.s32.totalorder %s95, %s97
      %p104 = scmp.eq.s32.totalorder %s24, 1
      %p105 = por %p103, %p104
      %p106 = scmp.ne.s32.totalorder %s97, %s98
      %p107 = scmp.eq.s32.totalorder %s24, 0
      %p108 = por %p106, %p107
      %p109 = scmp.ne.s32.totalorder %s97, %s98
      %p110 = scmp.eq.s32.totalorder %s25, 1
      %p111 = por %p109, %p110
      %p113 = scmp.ne.s32.totalorder %s98, %s112
      %p114 = scmp.eq.s32.totalorder %s25, 0
      %p115 = por %p113, %p114
      %s117 = sadd.s32 %s116, 1
      %p120 = scmp.eq.s32.totalorder %s19, 1
      %p121 = scmp.ne.s32.totalorder %s116, %s118
      %p122 = scmp.eq.s32.totalorder %s19, 0
      %p123 = por %p121, %p122
      %p124 = scmp.ne.s32.totalorder %s116, %s118
      %p125 = scmp.eq.s32.totalorder %s24, 1
      %p126 = por %p124, %p125
      %p127 = scmp.ne.s32.totalorder %s118, %s119
      %p128 = scmp.eq.s32.totalorder %s24, 0
      %p129 = por %p127, %p128
      %p130 = scmp.ne.s32.totalorder %s118, %s119
      %p131 = scmp.eq.s32.totalorder %s25, 1
      %p132 = por %p130, %p131
      %p134 = scmp.ne.s32.totalorder %s119, %s133
      %p135 = scmp.eq.s32.totalorder %s25, 0
      %p136 = por %p134, %p135
      %s137 = ssub.s32 %s19, %s26
      %p138 = scmp.eq.s32.totalorder %s137, 0
      %s140 = sadd.s32 %s139, 1
      %s141 = scalar_select %p138, %s139, %s140
      %p144 = pneg %p138
      %p145 = scmp.eq.s32.totalorder %s19, 1
      %p146 = por %p144, %p145
      %p147 = scmp.ne.s32.totalorder %s139, %s142
      %p148 = scmp.eq.s32.totalorder %s19, 0
      %p149 = por %p147, %p148
      %p150 = scmp.ne.s32.totalorder %s139, %s142
      %p151 = scmp.eq.s32.totalorder %s24, 1
      %p152 = por %p150, %p151
      %p153 = scmp.ne.s32.totalorder %s142, %s143
      %p154 = scmp.eq.s32.totalorder %s24, 0
      %p155 = por %p153, %p154
      %p156 = scmp.ne.s32.totalorder %s142, %s143
      %p157 = scmp.eq.s32.totalorder %s25, 1
      %p158 = por %p156, %p157
      %p160 = scmp.ne.s32.totalorder %s143, %s159
      %p161 = scmp.eq.s32.totalorder %s25, 0
      %p162 = por %p160, %p161
      %s163 = ssub.s32 %s19, %s26
      %p164 = scmp.eq.s32.totalorder %s163, 0
      %s166 = sadd.s32 %s165, 1
      %s167 = scalar_select %p164, %s165, %s166
      %p170 = pneg %p164
      %p171 = scmp.eq.s32.totalorder %s19, 1
      %p172 = por %p170, %p171
      %p173 = scmp.ne.s32.totalorder %s165, %s168
      %p174 = scmp.eq.s32.totalorder %s19, 0
      %p175 = por %p173, %p174
      %p176 = scmp.ne.s32.totalorder %s165, %s168
      %p177 = scmp.eq.s32.totalorder %s24, 1
      %p178 = por %p176, %p177
      %p179 = scmp.ne.s32.totalorder %s168, %s169
      %p180 = scmp.eq.s32.totalorder %s24, 0
      %p181 = por %p179, %p180
      %p182 = scmp.ne.s32.totalorder %s168, %s169
      %p183 = scmp.eq.s32.totalorder %s25, 1
      %p184 = por %p182, %p183
      %p186 = scmp.ne.s32.totalorder %s169, %s185
      %p187 = scmp.eq.s32.totalorder %s25, 0
      %p188 = por %p186, %p187
      %p189 = scmp.le.s32.totalorder 1, %s19
      %p190 = scmp.lt.s32.totalorder %s19, 3
      %p191 = pnand %p189, %p190
      %p192 = pneg %p191
      // Predicated region
      $region9: #{flow_forward.1} parent=5 // pred_check
        _
      $region10: #{flow_forward.1} parent=5 // pred_check_branch
        %194 = sbr.rel (%p191) target = $region12
      $region11: #{flow_forward.1} parent=5 // pred_region
        %s195 = ssub.s32 %s19, 1
        // Predicated region
        $region13: #{flow_forward.1} parent=11 // pred_check
          %p196 = pneg %p66
        $region14: #{flow_forward.1} parent=11 // pred_check_branch
          %198 = sbr.rel (%p196) target = $region16
        $region15: #{flow_forward.1} parent=11 // pred_region
          _
        $region16: #{flow_forward.1} parent=11 // pred_fallthru
          _
        // Predicated region
        $region17: #{flow_forward.1} parent=11 // pred_check
          %p199 = pneg %p87
        $region18: #{flow_forward.1} parent=11 // pred_check_branch
          %201 = sbr.rel (%p199) target = $region20
        $region19: #{flow_forward.1} parent=11 // pred_region
          _
        $region20: #{flow_forward.1} parent=11 // pred_fallthru
          _
        // Predicated region
        $region21: #{flow_forward.1} parent=11 // pred_check
          %p202 = pneg %p108
        $region22: #{flow_forward.1} parent=11 // pred_check_branch
          %204 = sbr.rel (%p202) target = $region24
        $region23: #{flow_forward.1} parent=11 // pred_region
          _
        $region24: #{flow_forward.1} parent=11 // pred_fallthru
          _
        // Predicated region
        $region25: #{flow_forward.1} parent=11 // pred_check
          %p205 = pneg %p129
        $region26: #{flow_forward.1} parent=11 // pred_check_branch
          %207 = sbr.rel (%p205) target = $region28
        $region27: #{flow_forward.1} parent=11 // pred_region
          _
        $region28: #{flow_forward.1} parent=11 // pred_fallthru
          _
      $region12: #{flow_forward.1} parent=5 // pred_fallthru
        _
      %p208 = scmp.lt.s32.totalorder %s19, 2
      // Predicated region
      $region29: #{flow_forward.1} parent=5 // pred_check
        %p209 = pneg %p208
      $region30: #{flow_forward.1} parent=5 // pred_check_branch
        %211 = sbr.rel (%p209) target = $region32
      $region31: #{flow_forward.1} parent=5 // pred_region
        // Predicated region
        $region33: #{flow_forward.1} parent=31 // pred_check
          %p212 = pneg %p39
        $region34: #{flow_forward.1} parent=31 // pred_check_branch
          %214 = sbr.rel (%p212) target = $region36
        $region35: #{flow_forward.1} parent=31 // pred_region
          %s215 = sand.u32 %s29, 1
          %s216 = sand.u32 %s29, 1
          %s217 = smul.addr %s216, 32
          %s218 = scalar_lea.vmem [#allocation2], %s217
          %s219 = smul.u32 2, %s19
          %s220 = smul.addr %s219, 8
          %s221 = scalar_lea.vmem %s0, %s220
          // Predicated region
          $region37: #{flow_forward.1} parent=35 // pred_check
            _
          $region38: #{flow_forward.1} parent=35 // pred_check_branch
            %223 = sbr.rel (0) target = $region40
          $region39: #{flow_forward.1} parent=35 // pred_region
            // Predicated region
            $region41: #{flow_forward.1} parent=39 // pred_check
              _
            $region42: #{flow_forward.1} parent=39 // pred_check_branch
              %225 = sbr.rel (0) target = $region44
            $region43: #{flow_forward.1} parent=39 // pred_region
              loop: start=0, step=1, limit=1
              $region45: #{flow_forward.1} parent=43 // loop_pre_header
                _
              $region46: #{flow_forward.1} parent=43 // loop_header
                %s227 = sphi 0, %s231
                %p228 = scmp.ge.s32.totalorder %s227, 1
                %s232 = sphi %s221, %s221
                %s233 = sphi %s218, %s218
              $region47: #{flow_forward.1} parent=43 // loop_header_branch
                %230 = sbr.rel (%p228) target = $region51
              $region48: #{flow_forward.1} parent=43 // loop_body
                %v234 = vld [vmem:[%s232] sm:$0xff]
                %235 = vst [vmem:[%s233] sm:$0xff] %v234
                %v236 = vld [vmem:[%s232 + $0x8] sm:$0xff]
                %237 = vst [vmem:[%s233 + $0x8] sm:$0xff] %v236
                %v238 = vld [vmem:[%s232 + $0x20] sm:$0xff]
                %239 = vst [vmem:[%s233 + $0x10] sm:$0xff] %v238
                %v240 = vld [vmem:[%s232 + $0x28] sm:$0xff]
                %241 = vst [vmem:[%s233 + $0x18] sm:$0xff] %v240
              $region49: #{flow_forward.1} parent=43 // loop_footer
                %s231 = sadd.s32 1, %s227
              $region50: #{flow_forward.1} parent=43 // loop_footer_branch
                %226 = sbr.rel target = $region46
              $region51: #{flow_forward.1} parent=43 // loop_exit
                _
            $region44: #{flow_forward.1} parent=39 // pred_fallthru
              _
            // Predicated region
            $region52: #{flow_forward.1} parent=39 // pred_check
              _
            $region53: #{flow_forward.1} parent=39 // pred_check_branch
              %243 = sbr.rel target = $region55
            $region54: #{flow_forward.1} parent=39 // pred_region
              _
            $region55: #{flow_forward.1} parent=39 // pred_fallthru
              _
          $region40: #{flow_forward.1} parent=35 // pred_fallthru
            _
          %244 = vnop
        $region36: #{flow_forward.1} parent=31 // pred_fallthru
          _
      $region32: #{flow_forward.1} parent=5 // pred_fallthru
        _
      %p245 = scmp.le.s32.totalorder 1, %s19
      %p246 = scmp.lt.s32.totalorder %s19, 3
      %p247 = pnand %p245, %p246
      %p248 = pneg %p247
      // Predicated region
      $region56: #{flow_forward.1} parent=5 // pred_check
        _
      $region57: #{flow_forward.1} parent=5 // pred_check_branch
        %250 = sbr.rel (%p247) target = $region59
      $region58: #{flow_forward.1} parent=5 // pred_region
        %s251 = ssub.s32 %s19, 1
        %s252 = sand.u32 %s32, 1
        %s253 = sand.u32 %s32, 1
        %s254 = smul.addr %s253, 32
        %s255 = scalar_lea.vmem [#allocation2], %s254
        // Predicated region
        $region60: #{flow_forward.1} parent=58 // pred_check
          %p256 = pneg %p45
        $region61: #{flow_forward.1} parent=58 // pred_check_branch
          %258 = sbr.rel (%p256) target = $region63
        $region62: #{flow_forward.1} parent=58 // pred_region
          _
        $region63: #{flow_forward.1} parent=58 // pred_fallthru
          _
        %s259 = sand.u32 %s32, 1
        %s260 = sand.u32 %s32, 1
        %s261 = smul.addr %s260, 32
        %s262 = scalar_lea.vmem [#allocation2], %s261
        %p263 = pneg %p45
        %p264 = pneg %p42
        %p265 = pneg %p66
        %p266 = pneg %p63
        %p267 = pneg %p87
        %p268 = pneg %p84
        %p269 = pneg %p108
        %p270 = pneg %p105
        %p271 = pneg %p129
        %p272 = pneg %p126
        %p273 = pneg %p155
        %p274 = pneg %p152
        %s275 = sand.u32 %s142, 1
        %s276 = scalar_lea.sflag [#allocation4], %s275
        %s277 = sand.u32 %s142, 1
        %s278 = smul.addr %s277, 32
        %s279 = scalar_lea.vmem [#allocation3], %s278
        %p280 = pneg %p181
        %p281 = pneg %p178
        %s282 = sand.u32 %s168, 1
        %s283 = scalar_lea.sflag [#allocation6], %s282
        %s284 = sand.u32 %s168, 1
        %s285 = smul.addr %s284, 2
        %s286 = scalar_lea.vmem [#allocation5], %s285
        %s287 = smul.u32 2, %s24
        %s288 = smul.u32 2, %s24
        %s289 = smul.u32 2, %s24
        %v290 = vld [vmem:[%s255] sm:$0xff]
        %v291 = vld [vmem:[%s255 + $0x8] sm:$0xff]
        %v292 = vld [vmem:[%s255 + $0x10] sm:$0xff]
        %v293 = vld [vmem:[%s255 + $0x18] sm:$0xff]
        %v294 = vld [vmem:[%s1] sm:$0xff]
        %v295 = vld [vmem:[%s1 + $0x8] sm:$0xff]
        %v296 = vld [vmem:[%s1 + $0x10] sm:$0xff]
        %v297 = vld [vmem:[%s1 + $0x18] sm:$0xff]
        %v298 = vld [vmem:[%s2] sm:$0xff]
        %v299 = vld [vmem:[%s2 + $0x8] sm:$0xff]
        %v300 = vld [vmem:[%s2 + $0x10] sm:$0xff]
        %v301 = vld [vmem:[%s2 + $0x18] sm:$0xff]
        %303 = vset.pattern.permute.xlu0 0
        %304 = vperm.xlu0 %303, %v298
        %v305 = vpop.permute.xlu0 %304
        %308 = vset.pattern.permute.xlu0 0
        %309 = vperm.xlu0 %308, %v299
        %v310 = vpop.permute.xlu0 %309
        %313 = vset.pattern.permute.xlu0 0
        %314 = vperm.xlu0 %313, %v300
        %v315 = vpop.permute.xlu0 %314
        %318 = vset.pattern.permute.xlu0 0
        %319 = vperm.xlu0 %318, %v301
        %v320 = vpop.permute.xlu0 %319
        %vm322 = vcmask 64512
        %v324 = vsel %vm322, %v294, 0
        %v327 = vsel %vm322, %v295, 0
        %v330 = vsel %vm322, %v296, 0
        %v333 = vsel %vm322, %v297, 0
        %335 = vmatprep.subr.mxu0 %v291
        %336 = vmatpush1.msra.mxu0 %v290
        %337 = vmatprep.subr.mxu0 0.0
        %338 = vmatpush1.msra.mxu0 0.0
        %339 = vmatprep.subr.mxu0 0.0
        %340 = vmatpush1.msra.mxu0 0.0
        %341 = vmatprep.subr.mxu0 0.0
        %342 = vmatpush1.msra.mxu0 0.0
        %343 = vmatprep.subr.mxu0 0.0
        %344 = vmatpush1.msra.mxu0 0.0
        %345 = vmatprep.subr.mxu0 0.0
        %346 = vmatpush1.msra.mxu0 0.0
        %347 = vmatprep.subr.mxu0 0.0
        %348 = vmatpush1.msra.mxu0 0.0
        %349 = vmatprep.subr.mxu0 0.0
        %350 = vmatpush1.msra.mxu0 0.0
        %351 = vmatprep.subr.mxu0 0.0
        %352 = vmatpush1.msra.mxu0 0.0
        %353 = vmatprep.subr.mxu0 0.0
        %354 = vmatpush1.msra.mxu0 0.0
        %355 = vmatprep.subr.mxu0 0.0
        %356 = vmatpush1.msra.mxu0 0.0
        %357 = vmatprep.subr.mxu0 0.0
        %358 = vmatpush1.msra.mxu0 0.0
        %359 = vmatprep.subr.mxu0 0.0
        %360 = vmatpush1.msra.mxu0 0.0
        %361 = vmatprep.subr.mxu0 0.0
        %362 = vmatpush1.msra.mxu0 0.0
        %363 = vmatprep.subr.mxu0 0.0
        %364 = vmatpush1.msra.mxu0 0.0
        %365 = vmatprep.subr.mxu0 0.0
        %366 = vmatpush1.msra.mxu0 0.0
        %367 = vmatprep.subr.mxu0 0.0
        %368 = vmatpush1.msra.mxu0 0.0
        %369 = vmatprep.subr.mxu0 0.0
        %370 = vmatpush1.msra.mxu0 0.0
        %371 = vmatprep.subr.mxu0 0.0
        %372 = vmatpush1.msra.mxu0 0.0
        %373 = vmatprep.subr.mxu0 0.0
        %374 = vmatpush1.msra.mxu0 0.0
        %375 = vmatprep.subr.mxu0 0.0
        %376 = vmatpush1.msra.mxu0 0.0
        %377 = vmatprep.subr.mxu0 0.0
        %378 = vmatpush1.msra.mxu0 0.0
        %379 = vmatprep.subr.mxu0 0.0
        %380 = vmatpush1.msra.mxu0 0.0
        %381 = vmatprep.subr.mxu0 0.0
        %382 = vmatpush1.msra.mxu0 0.0
        %383 = vmatprep.subr.mxu0 0.0
        %384 = vmatpush1.msra.mxu0 0.0
        %385 = vmatprep.subr.mxu0 0.0
        %386 = vmatpush1.msra.mxu0 0.0
        %387 = vmatprep.subr.mxu0 0.0
        %388 = vmatpush1.msra.mxu0 0.0
        %389 = vmatprep.subr.mxu0 0.0
        %390 = vmatpush1.msra.mxu0 0.0
        %391 = vmatprep.subr.mxu0 0.0
        %392 = vmatpush1.msra.mxu0 0.0
        %393 = vmatprep.subr.mxu0 0.0
        %394 = vmatpush1.msra.mxu0 0.0
        %395 = vmatprep.subr.mxu0 0.0
        %396 = vmatpush1.msra.mxu0 0.0
        %397 = vmatprep.subr.mxu0 0.0
        %398 = vmatpush1.msra.mxu0 0.0
        %399 = vmatprep.mubr.f32.mxu0 0.0
        %400 = vmatmul.mubr.f32.gmra.mrb[0].mxu0 %v324
        %v401 = vpop.f32.mrb[0].mxu0
        %v402 = vadd.f32 %v305, %v401
        %v403 = vpop.f32.mrb[0].mxu0
        %v404 = vadd.f32 %v305, %v403
        %405 = vmatprep.mubr.f32.mxu0 0.0
        %406 = vmatmul.mubr.f32.gmra.mrb[0].mxu0 %v327
        %v407 = vpop.f32.mrb[0].mxu0
        %v408 = vadd.f32 %v310, %v407
        %v409 = vpop.f32.mrb[0].mxu0
        %v410 = vadd.f32 %v310, %v409
        %411 = vmatprep.mubr.f32.mxu0 0.0
        %412 = vmatmul.mubr.f32.gmra.mrb[0].mxu0 %v330
        %v413 = vpop.f32.mrb[0].mxu0
        %v414 = vadd.f32 %v315, %v413
        %v415 = vpop.f32.mrb[0].mxu0
        %v416 = vadd.f32 %v315, %v415
        %417 = vmatprep.mubr.f32.mxu0 0.0
        %418 = vmatmul.mubr.f32.gmra.mrb[0].mxu0 %v333
        %v419 = vpop.f32.mrb[0].mxu0
        %v420 = vadd.f32 %v320, %v419
        %v421 = vpop.f32.mrb[0].mxu0
        %v422 = vadd.f32 %v320, %v421
        %423 = vdwg.mxu0
        %v424 = vtanh.pop %v402
        %v425 = vtanh.pop %v404
        %v426 = vtanh.pop %v408
        %v427 = vtanh.pop %v410
        %v428 = vtanh.pop %v414
        %v429 = vtanh.pop %v416
        %v430 = vtanh.pop %v420
        %v431 = vtanh.pop %v422
        %v432 = vld [vmem:[%s3] sm:$0xff]
        %v433 = vld [vmem:[%s3 + $0x8] sm:$0xff]
        %v434 = vld [vmem:[%s4] sm:$0xff]
        %v435 = vld [vmem:[%s4 + $0x8] sm:$0xff]
        %437 = vset.pattern.permute.xlu0 0
        %438 = vperm.xlu0 %437, %v434
        %v439 = vpop.permute.xlu0 %438
        %442 = vset.pattern.permute.xlu0 0
        %443 = vperm.xlu0 %442, %v435
        %v444 = vpop.permute.xlu0 %443
        %vm446 = vcmask 261120
        %v448 = vsel %vm446, %v432, 0
        %v451 = vsel %vm446, %v433, 0
        %453 = vmatprep.subr.mxu0 %v425
        %454 = vmatpush1.msra.mxu0 %v424
        %455 = vmatprep.subr.mxu0 %v427
        %456 = vmatpush1.msra.mxu0 %v426
        %457 = vmatprep.subr.mxu0 %v429
        %458 = vmatpush1.msra.mxu0 %v428
        %459 = vmatprep.subr.mxu0 %v431
        %460 = vmatpush1.msra.mxu0 %v430
        %461 = vmatprep.subr.mxu0 0.0
        %462 = vmatpush1.msra.mxu0 0.0
        %463 = vmatprep.subr.mxu0 0.0
        %464 = vmatpush1.msra.mxu0 0.0
        %465 = vmatprep.subr.mxu0 0.0
        %466 = vmatpush1.msra.mxu0 0.0
        %467 = vmatprep.subr.mxu0 0.0
        %468 = vmatpush1.msra.mxu0 0.0
        %469 = vmatprep.subr.mxu0 0.0
        %470 = vmatpush1.msra.mxu0 0.0
        %471 = vmatprep.subr.mxu0 0.0
        %472 = vmatpush1.msra.mxu0 0.0
        %473 = vmatprep.subr.mxu0 0.0
        %474 = vmatpush1.msra.mxu0 0.0
        %475 = vmatprep.subr.mxu0 0.0
        %476 = vmatpush1.msra.mxu0 0.0
        %477 = vmatprep.subr.mxu0 0.0
        %478 = vmatpush1.msra.mxu0 0.0
        %479 = vmatprep.subr.mxu0 0.0
        %480 = vmatpush1.msra.mxu0 0.0
        %481 = vmatprep.subr.mxu0 0.0
        %482 = vmatpush1.msra.mxu0 0.0
        %483 = vmatprep.subr.mxu0 0.0
        %484 = vmatpush1.msra.mxu0 0.0
        %485 = vmatprep.subr.mxu0 0.0
        %486 = vmatpush1.msra.mxu0 0.0
        %487 = vmatprep.subr.mxu0 0.0
        %488 = vmatpush1.msra.mxu0 0.0
        %489 = vmatprep.subr.mxu0 0.0
        %490 = vmatpush1.msra.mxu0 0.0
        %491 = vmatprep.subr.mxu0 0.0
        %492 = vmatpush1.msra.mxu0 0.0
        %493 = vmatprep.subr.mxu0 0.0
        %494 = vmatpush1.msra.mxu0 0.0
        %495 = vmatprep.subr.mxu0 0.0
        %496 = vmatpush1.msra.mxu0 0.0
        %497 = vmatprep.subr.mxu0 0.0
        %498 = vmatpush1.msra.mxu0 0.0
        %499 = vmatprep.subr.mxu0 0.0
        %500 = vmatpush1.msra.mxu0 0.0
        %501 = vmatprep.subr.mxu0 0.0
        %502 = vmatpush1.msra.mxu0 0.0
        %503 = vmatprep.subr.mxu0 0.0
        %504 = vmatpush1.msra.mxu0 0.0
        %505 = vmatprep.subr.mxu0 0.0
        %506 = vmatpush1.msra.mxu0 0.0
        %507 = vmatprep.subr.mxu0 0.0
        %508 = vmatpush1.msra.mxu0 0.0
        %509 = vmatprep.subr.mxu0 0.0
        %510 = vmatpush1.msra.mxu0 0.0
        %511 = vmatprep.subr.mxu0 0.0
        %512 = vmatpush1.msra.mxu0 0.0
        %513 = vmatprep.subr.mxu0 0.0
        %514 = vmatpush1.msra.mxu0 0.0
        %515 = vmatprep.subr.mxu0 0.0
        %516 = vmatpush1.msra.mxu0 0.0
        %517 = vmatprep.mubr.f32.mxu0 0.0
        %518 = vmatmul.mubr.f32.gmra.mrb[0].mxu0 %v448
        %v519 = vpop.f32.mrb[0].mxu0
        %v520 = vadd.f32 %v439, %v519
        %v521 = vpop.f32.mrb[0].mxu0
        %v522 = vadd.f32 %v439, %v521
        %523 = vmatprep.mubr.f32.mxu0 0.0
        %524 = vmatmul.mubr.f32.gmra.mrb[0].mxu0 %v451
        %v525 = vpop.f32.mrb[0].mxu0
        %v526 = vadd.f32 %v444, %v525
        %v527 = vpop.f32.mrb[0].mxu0
        %v528 = vadd.f32 %v444, %v527
        %529 = vdwg.mxu0
        %v530 = vtanh.pop %v520
        %v531 = vtanh.pop %v522
        %v532 = vmul.f32 %v530, 1.442695
        %v533 = vpow.pop %v532
        %v534 = vmul.f32 %v531, 1.442695
        %v535 = vpow.pop %v534
        %v536 = vmul.f32 %v292, %v533
        %v537 = vmul.f32 %v293, %v535
        %v538 = vadd.f32 %v536, %v526
        %v539 = vadd.f32 %v537, %v528
        %540 = vst [vmem:[%s279] sm:$0xff] %v290
        %541 = vst [vmem:[%s279 + $0x8] sm:$0xff] %v291
        %542 = vst [vmem:[%s279 + $0x10] sm:$0xff] %v538
        %543 = vst [vmem:[%s279 + $0x18] sm:$0xff] %v539
        %v544 = vrot.slane %v530, 4
        %v545 = vadd.f32 %v530, %v544
        %v546 = vrot.slane %v545, 2
        %v547 = vadd.f32 %v545, %v546
        %v548 = vrot.slane %v547, 1
        %v549 = vadd.f32 %v547, %v548
        %v550 = vrot.slane %v531, 4
        %v551 = vadd.f32 %v531, %v550
        %v552 = vrot.slane %v551, 2
        %v553 = vadd.f32 %v551, %v552
        %v554 = vrot.slane %v553, 1
        %v555 = vadd.f32 %v553, %v554
        %v558 = vcombine.low %v549, %v555
        %v560 = vunpack.c.l.s4 1966171168
        %v561 = vunpack.c.0.s8 %v560
        %v562 = vlaneseq
        %v563 = vshrl.u32 %v562, 7
        %v564 = vsub.s32 %v561, %v563
        %v565 = vrot.slane %v558, %v564
        %v567 = vunpack.c.l.s4 1966171168
        %v568 = vunpack.c.0.s8 %v567
        %v569 = vlaneseq
        %v570 = vshrl.u32 %v569, 7
        %v571 = vsub.s32 %v568, %v570
        %v572 = vrot.slane %v565, %v571
        %v574 = vlaneseq
        %vm575 = vcmp.ge.s32.totalorder %v574, 0
        %vm576 = vcmp.lt.s32.totalorder %v574, 256
        %vm577 = vmand %vm575, %vm576
        %578 = vst.msk [vmem:[%s286] sm:$0x3] %vm577, %v572
        %s579 = sand.u32 %s142, 1
        %s580 = scalar_lea.sflag [#allocation4], %s579
        %s581 = sand.u32 %s142, 1
        %s582 = smul.addr %s581, 32
        %s583 = scalar_lea.vmem [#allocation3], %s582
        %s584 = sand.u32 %s168, 1
        %s585 = scalar_lea.sflag [#allocation6], %s584
        %s586 = sand.u32 %s168, 1
        %s587 = smul.addr %s586, 2
        %s588 = scalar_lea.vmem [#allocation5], %s587
        // Predicated region
        $region64: #{flow_forward.1} parent=58 // pred_check
          %p589 = pneg %p152
        $region65: #{flow_forward.1} parent=58 // pred_check_branch
          %591 = sbr.rel (%p589) target = $region67
        $region66: #{flow_forward.1} parent=58 // pred_region
          %s592 = smul.u32 2, %s24
          %s594 = ssub.s32 512, 512
          %595 = vsyncadd %s580, %s594
          %s596 = smul.addr %s592, 128
          %s597 = scalar_lea.hbm %s5, %s596
          %s598 = sshll.u32 %s583, 4
          %s599 = int_to_ptr.vmem [resolvable:$true] %s598
          %604 = dma.vmem_to_hbm [thread:$0]  %s599, 512, %s597, %s580, 256, 512, 16
        $region67: #{flow_forward.1} parent=58 // pred_fallthru
          _
        // Predicated region
        $region68: #{flow_forward.1} parent=58 // pred_check
          %p605 = pneg %p178
        $region69: #{flow_forward.1} parent=58 // pred_check_branch
          %607 = sbr.rel (%p605) target = $region71
        $region70: #{flow_forward.1} parent=58 // pred_region
          %s608 = smul.u32 2, %s24
          %s610 = ssub.s32 32, 32
          %611 = vsyncadd %s585, %s610
          %s612 = smul.addr %s608, 16
          %s613 = scalar_lea.hbm %s6, %s612
          %s615 = sshll.u32 %s588, 4
          %s616 = int_to_ptr.vmem [resolvable:$true] %s615
          %618 = dma.vmem_to_hbm [thread:$0]  %s616, 32, %s613, %s585
        $region71: #{flow_forward.1} parent=58 // pred_fallthru
          _
      $region59: #{flow_forward.1} parent=5 // pred_fallthru
        _
      %p619 = scmp.le.s32.totalorder 2, %s19
      // Predicated region
      $region72: #{flow_forward.1} parent=5 // pred_check
        %p620 = pneg %p619
      $region73: #{flow_forward.1} parent=5 // pred_check_branch
        %622 = sbr.rel (%p620) target = $region75
      $region74: #{flow_forward.1} parent=5 // pred_region
        %s623 = ssub.s32 %s19, 2
        // Predicated region
        $region76: #{flow_forward.1} parent=74 // pred_check
          %p624 = pneg %p158
        $region77: #{flow_forward.1} parent=74 // pred_check_branch
          %626 = sbr.rel (%p624) target = $region79
        $region78: #{flow_forward.1} parent=74 // pred_region
          %s627 = sand.u32 %s143, 1
          %s628 = scalar_lea.sflag [#allocation4], %s627
          %s629 = sand.u32 %s143, 1
          %s630 = smul.addr %s629, 32
          %s631 = scalar_lea.vmem [#allocation3], %s630
          %632 = dma.done %s628, 512
        $region79: #{flow_forward.1} parent=74 // pred_fallthru
          _
        // Predicated region
        $region80: #{flow_forward.1} parent=74 // pred_check
          %p633 = pneg %p184
        $region81: #{flow_forward.1} parent=74 // pred_check_branch
          %635 = sbr.rel (%p633) target = $region83
        $region82: #{flow_forward.1} parent=74 // pred_region
          %s636 = sand.u32 %s169, 1
          %s637 = scalar_lea.sflag [#allocation6], %s636
          %s638 = sand.u32 %s169, 1
          %s639 = smul.addr %s638, 2
          %s640 = scalar_lea.vmem [#allocation5], %s639
          %641 = dma.done %s637, 32
        $region83: #{flow_forward.1} parent=74 // pred_fallthru
          _
      $region75: #{flow_forward.1} parent=5 // pred_fallthru
        _
    $region6: #{flow_forward.1} parent=1 // loop_footer
      %s23 = sadd.s32 1, %s19
    $region7: #{flow_forward.1} parent=1 // loop_footer_branch
      %18 = sbr.rel target = $region3
    $region8: #{flow_forward.1} parent=1 // loop_exit
      _
    %642 = vsyncpa [#allocation4], 1
    %s643 = scalar_lea.sflag [#allocation4], 1
    %644 = vsyncpa %s643, 1
    %645 = vsyncpa [#allocation6], 1
    %s646 = scalar_lea.sflag [#allocation6], 1
    %647 = vsyncpa %s646, 1

</llo_original>
